<compile_context>
chip_gen: v7x
topology: tpu7x:2x2x1
jax: 0.10.0
libtpu: 0.0.40
codegen_flags: <defaults>
</compile_context>

<pallas_src>
import functools
import math

import numpy as np
import jax
import jax.numpy as jnp
from jax.experimental import pallas as pl
from jax.experimental.pallas import tpu as pltpu


# ----------------------------------------------------------------------------
# Interpolation matrices (host-side numpy, cached)
# ----------------------------------------------------------------------------
@functools.lru_cache(maxsize=64)
def bilinear_matrix(L, Lo, scale):
    """PyTorch bilinear, align_corners=False, explicit scale_factor (uses 1/scale)."""
    inv = 1.0 / scale
    dst = np.arange(Lo, dtype=np.float64)
    src = np.maximum((dst + 0.5) * inv - 0.5, 0.0)
    i0 = np.minimum(np.floor(src).astype(np.int64), L - 1)
    i1 = np.minimum(i0 + 1, L - 1)
    frac = src - i0
    M = np.zeros((Lo, L), np.float32)
    M[np.arange(Lo), i0] += (1.0 - frac)
    M[np.arange(Lo), i1] += frac
    return M


@functools.lru_cache(maxsize=64)
def nearest_matrix(L, Lo, scale):
    """PyTorch 'nearest' with explicit scale_factor: src = min(floor(dst/scale), L-1)."""
    # NOTE: matches F.interpolate(mode='nearest', scale_factor=s,
    # recompute_scale_factor=False); 'nearest-exact' / recomputed scales differ.
    inv = 1.0 / scale
    dst = np.arange(Lo, dtype=np.float64)
    src = np.minimum(np.floor(dst * inv).astype(np.int64), L - 1)
    M = np.zeros((Lo, L), np.float32)
    M[np.arange(Lo), src] = 1.0
    return M


# ----------------------------------------------------------------------------
# Block-size selection
# ----------------------------------------------------------------------------
_MAX_PLANES_PER_STEP = 64  # bounds the static per-plane unroll in the kernel


def _vmem_capacity_bytes():
    try:
        return int(pltpu.get_tpu_info().vmem_capacity_bytes)
    except Exception:
        return 64 * 1024 * 1024  # conservative: v7x per-TensorCore VMEM


def _sublane_multiple(h, hout):
    mh = 8 // math.gcd(h, 8)
    mo = 8 // math.gcd(hout, 8)
    return (mh * mo) // math.gcd(mh, mo)


def _choose_num_planes(G, H, W, Hout, Wout, x_item, out_item, cd_item, budget):
    per_plane = (2 * H * W * x_item          # input block, double-buffered
                 + 2 * Hout * Wout * out_item  # output block, double-buffered
                 + H * Wout * 4                # f32 scratch (single copy)
                 + H * W * cd_item             # in-kernel cast of x
                 + H * Wout * 4)               # matmul result value before store
    fixed = 2 * (Hout * H + W * Wout) * cd_item  # A and B^T, double-buffered
    avail = max(budget - fixed, per_plane)
    gb = max(1, min(G, int(avail // per_plane), _MAX_PLANES_PER_STEP))
    if G >= 2:                                   # keep >= 2 grid steps (v7x megacore)
        gb = min(gb, (G + 1) // 2)
    # (8,128) constraint: block sublane dims Gb*H / Gb*Hout must be multiples of 8
    # unless the block spans the full stacked dimension.
    if gb < G and ((gb * H) % 8 or (gb * Hout) % 8):
        m = _sublane_multiple(H, Hout)
        gb = max(m, (gb // m) * m)
        if gb >= G:
            gb = G                               # full-extent block is always legal
    resident = fixed + gb * per_plane
    return gb, resident


# ----------------------------------------------------------------------------
# Pallas kernel
# ----------------------------------------------------------------------------
def _resize_kernel(a_ref, x_ref, bt_ref, o_ref, tmp_ref, *, gb, h, hout,
                   compute_dtype):
    # a_ref  : (Hout, H)        row-interpolation matrix (grid-invariant)
    # x_ref  : (gb*H, W)        gb stacked planes, 4-byte dtype
    # bt_ref : (W, Wout)        column-interpolation matrix, transposed (invariant)
    # o_ref  : (gb*Hout, Wout)  result, written in its final 4-byte dtype
    # tmp_ref: (gb*H, Wout)     f32 scratch for the column-resized planes
    x = x_ref[...].astype(jnp.float32).astype(compute_dtype)      # cast on the VPU
    # Column resize of all gb planes at once: one big MXU matmul.
    tmp_ref[...] = jnp.dot(x, bt_ref[...],
                           preferred_element_type=jnp.float32)    # (gb*H, Wout) f32
    a = a_ref[...]
    # Row resize per plane: gb small matmuls, statically unrolled (gb <= 64).
    for g in range(gb):
        blk = tmp_ref[g * h:(g + 1) * h, :]                       # (H, Wout) f32
        res = jnp.dot(a, blk, preferred_element_type=jnp.float32)  # (Hout, Wout)
        o_ref[g * hout:(g + 1) * hout, :] = res.astype(o_ref.dtype)


# ----------------------------------------------------------------------------
# pallas_call wrapper
# ----------------------------------------------------------------------------
def _resize_planes(x, A_np, B_np, *, out_dtype, compute_dtype=jnp.float32):
    """Per-plane separable resize: out[g] = A @ x[g] @ B^T, cast to out_dtype.

    x          : (G, H, W), 4-byte dtype (float32 / int32).
    A_np, B_np : numpy (Hout, H) / (Wout, W) interpolation matrices.
    out_dtype  : 4-byte dtype; the cast happens at the in-kernel store.
    """
    G, H, W = x.shape
    Hout, Wout = int(A_np.shape[0]), int(B_np.shape[0])
    cd = np.dtype(compute_dtype)
    x_item = np.dtype(x.dtype).itemsize
    out_item = np.dtype(out_dtype).itemsize
    assert x_item == 4 and out_item == 4, (
        "kernel I/O restricted to 4-byte dtypes (no sub-word tiling constraints)")

    vmem_cap = _vmem_capacity_bytes()
    budget = min(vmem_cap // 2, 48 * 1024 * 1024)   # resident-block byte budget
    gb, resident = _choose_num_planes(G, H, W, Hout, Wout,
                                      x_item, out_item, cd.itemsize, budget)
    # TODO(synk): planes too large for the budget (e.g. 4k x 4k f32 on v7x) would need
    # a second grid axis tiling Wout; not implemented here.
    vmem_limit = int(min(vmem_cap - 4 * 2**20,
                         max(resident + 8 * 2**20, 32 * 2**20)))

    a = jnp.asarray(A_np, dtype=cd)          # (Hout, H)
    bt = jnp.asarray(B_np.T, dtype=cd)       # (W, Wout)
    x2d = x.reshape(G * H, W)                # free reshape (row-major), no pad/copy

    grid = (pl.cdiv(G, gb),)
    kernel = functools.partial(_resize_kernel, gb=gb, h=H, hout=Hout,
                               compute_dtype=cd)
    out = pl.pallas_call(
        kernel,
        out_shape=jax.ShapeDtypeStruct((G * Hout, Wout), out_dtype),
        grid=grid,
        in_specs=[
            pl.BlockSpec((Hout, H), lambda g: (0, 0)),     # A: grid-invariant
            pl.BlockSpec((gb * H, W), lambda g: (g, 0)),   # gb stacked planes
            pl.BlockSpec((W, Wout), lambda g: (0, 0)),     # B^T: grid-invariant
        ],
        out_specs=pl.BlockSpec((gb * Hout, Wout), lambda g: (g, 0)),
        scratch_shapes=[pltpu.VMEM((gb * H, Wout), jnp.float32)],
        compiler_params=pltpu.CompilerParams(
            dimension_semantics=("parallel",),
            vmem_limit_bytes=vmem_limit),
    )(a, x2d, bt)
    return out.reshape(G, Hout, Wout)


# ----------------------------------------------------------------------------
# Forward pass (mode='categorical')
# ----------------------------------------------------------------------------
def multi_scale_resize_categorical(batch, scale, num_classes=None):
    # TODO(synk): `random.choice(self.scales)` is host-side Python randomness in the
    # original module; the chosen scale is passed in deterministically here.
    im, (damage_mask, damage) = batch
    if scale == 1.0:
        return batch

    N, C, H, W = im.shape
    Hout = int(math.floor(H * scale))
    Wout = int(math.floor(W * scale))

    Rh = bilinear_matrix(H, Hout, float(scale))   # (Hout, H)
    Rw = bilinear_matrix(W, Wout, float(scale))   # (Wout, W)
    Sh = nearest_matrix(H, Hout, float(scale))
    Sw = nearest_matrix(W, Wout, float(scale))

    # ---- image: bilinear, align_corners=False ------------------------------
    # TODO(synk): bf16-native images currently take an f32 round-trip; a bf16 I/O
    # path would need (16,128)-tile-friendly block shapes.
    im_in = im if im.dtype == jnp.float32 else im.astype(jnp.float32)
    im_out = _resize_planes(im_in.reshape(N * C, H, W), Rh, Rw,
                            out_dtype=jnp.float32, compute_dtype=jnp.float32)
    im_out = im_out.reshape(N, C, Hout, Wout).astype(im.dtype)

    # ---- damage_mask / damage: nearest-neighbour selection ------------------
    # Nearest resize of an integer label map is pure index selection, so resizing
    # the labels directly is exactly equivalent to one_hot -> nearest -> argmax.
    # bf16 MXU operands are bit-exact for integer values < 256.
    mask_cd = (jnp.bfloat16 if damage_mask.dtype in (jnp.bool_, jnp.uint8, jnp.int8)
               else jnp.float32)
    lbl_cd = (jnp.bfloat16 if (num_classes is not None and num_classes <= 256)
              else jnp.float32)

    mask_out = _resize_planes(damage_mask.astype(jnp.int32), Sh, Sw,
                              out_dtype=jnp.int32, compute_dtype=mask_cd)
    mask_out = mask_out.astype(damage_mask.dtype)

    dmg_in = damage if damage.dtype == jnp.int32 else damage.astype(jnp.int32)
    dmg_out = _resize_planes(dmg_in, Sh, Sw,
                             out_dtype=jnp.int32, compute_dtype=lbl_cd)
    dmg_out = dmg_out.astype(damage.dtype)
    # TODO(synk): a scalar-prefetch gather kernel would make the nearest path purely
    # HBM-bandwidth-bound instead of MXU-bound at large resolutions.

    return im_out, (mask_out, dmg_out)


# ----------------------------------------------------------------------------
if __name__ == "__main__":
    key = jax.random.PRNGKey(0)
    k_im, k_mask, k_dmg = jax.random.split(key, 3)

    N, C, H, W = 2, 4, 16, 16
    NUM_CLASSES = 4

    # Integer-grid image values keep every bilinear product exactly representable,
    # so the comparison below is robust to MXU f32-emulation differences.
    im = jax.random.randint(k_im, (N, C, H, W), 0, 256).astype(jnp.float32) / 256.0
    damage_mask = (jax.random.uniform(k_mask, (N, H, W)) > 0.5).astype(jnp.uint8)
    damage = jax.random.randint(k_dmg, (N, H, W), 0, NUM_CLASSES, dtype=jnp.int32)

    # Deterministic stand-in for `random.choice(self.scales)`; non-1.0 so the
    # resize kernels actually execute.
    scale = 0.5

    im_out, (mask_out, dmg_out) = multi_scale_resize_categorical(
        (im, (damage_mask, damage)), scale, num_classes=NUM_CLASSES)
    jax.block_until_ready((im_out, mask_out, dmg_out))

    # ---- sanity checks against a pure-JAX reference of the original math ----
    Hout, Wout = int(H * scale), int(W * scale)
    Rh = jnp.asarray(bilinear_matrix(H, Hout, scale))
    Rw = jnp.asarray(bilinear_matrix(W, Wout, scale))
    Sh = jnp.asarray(nearest_matrix(H, Hout, scale))
    Sw = jnp.asarray(nearest_matrix(W, Wout, scale))
    hp = jax.lax.Precision.HIGHEST

    im_ref = jnp.einsum('oh,nchw,pw->ncop', Rh, im, Rw, precision=hp)
    mask_ref = jnp.einsum('oh,nhw,pw->nop', Sh, damage_mask.astype(jnp.float32), Sw,
                          precision=hp).astype(damage_mask.dtype)
    # reference keeps the original one_hot -> nearest -> argmax formulation
    dmg_ref = jnp.argmax(
        jnp.einsum('oh,nkhw,pw->nkop', Sh,
                   jax.nn.one_hot(damage, NUM_CLASSES, dtype=jnp.float32, axis=1), Sw,
                   precision=hp),
        axis=1).astype(damage.dtype)

    assert im_out.shape == (N, C, Hout, Wout) and im_out.dtype == im.dtype
    assert mask_out.shape == (N, Hout, Wout) and mask_out.dtype == damage_mask.dtype
    assert dmg_out.shape == (N, Hout, Wout) and dmg_out.dtype == damage.dtype
    # loose tolerance only to be robust to MXU f32 multi-pass differences
    assert np.allclose(np.asarray(im_out), np.asarray(im_ref), atol=1e-2), (
        float(np.abs(np.asarray(im_out) - np.asarray(im_ref)).max()))
    assert np.array_equal(np.asarray(mask_out), np.asarray(mask_ref))
    assert np.array_equal(np.asarray(dmg_out), np.asarray(dmg_ref))

    print("KERNEL_OK")
</pallas_src>

<mosaic_0001>
module attributes {stable_mosaic.version = 11 : i64} {
  func.func @_resize_kernel(%arg0: i32, %arg1: memref<8x16xf32, #tpu.memory_space<vmem>>, %arg2: memref<64x16xf32, #tpu.memory_space<vmem>>, %arg3: memref<16x8xf32, #tpu.memory_space<vmem>>, %arg4: memref<32x8xf32, #tpu.memory_space<vmem>>, %arg5: memref<64x8xf32, #tpu.memory_space<vmem>>) attributes {dimension_semantics = [#tpu.dimension_semantics<parallel>], iteration_bounds = array<i64: 2>, scalar_prefetch = 0 : i64, scratch_operands = 1 : i64, tpu.core_type = #tpu.core_type<tc>, window_params = [{pipeline_mode = #tpu.pipeline_mode<synchronous>, transform_indices = @transform_0, window_bounds = array<i64: 8, 16>}, {transform_indices = @transform_1, window_bounds = array<i64: 64, 16>}, {pipeline_mode = #tpu.pipeline_mode<synchronous>, transform_indices = @transform_2, window_bounds = array<i64: 16, 8>}, {transform_indices = @transform_3, window_bounds = array<i64: 32, 8>}]} {
    %c0 = arith.constant 0 : index
    %c0_0 = arith.constant 0 : index
    %0 = vector.load %arg2[%c0, %c0_0] : memref<64x16xf32, #tpu.memory_space<vmem>>, vector<64x16xf32>
    %c0_1 = arith.constant 0 : index
    %c0_2 = arith.constant 0 : index
    %1 = vector.load %arg3[%c0_1, %c0_2] : memref<16x8xf32, #tpu.memory_space<vmem>>, vector<16x8xf32>
    %cst = arith.constant dense<0.000000e+00> : vector<64x8xf32>
    %2 = tpu.matmul %0, %1, %cst {dimension_numbers = #tpu.dot_dimension_numbers<[1], [0], [0], [1], [0, 0, 1, 1], [], []>} : vector<64x16xf32>, vector<16x8xf32>, vector<64x8xf32> -> vector<64x8xf32>
    %c0_3 = arith.constant 0 : index
    %c0_4 = arith.constant 0 : index
    %3 = vector.load %arg5[%c0_3, %c0_4] : memref<64x8xf32, #tpu.memory_space<vmem>>, vector<64x8xf32>
    tpu.vector_store %arg5[%c0_3, %c0_4], %2 {strides = array<i32>} : memref<64x8xf32, #tpu.memory_space<vmem>>, vector<64x8xf32>,
    %c0_5 = arith.constant 0 : index
    %c0_6 = arith.constant 0 : index
    %4 = vector.load %arg1[%c0_5, %c0_6] : memref<8x16xf32, #tpu.memory_space<vmem>>, vector<8x16xf32>
    %c0_7 = arith.constant 0 : index
    %c0_8 = arith.constant 0 : index
    %5 = vector.load %arg5[%c0_7, %c0_8] : memref<64x8xf32, #tpu.memory_space<vmem>>, vector<16x8xf32>
    %cst_9 = arith.constant dense<0.000000e+00> : vector<8x8xf32>
    %6 = tpu.matmul %4, %5, %cst_9 {dimension_numbers = #tpu.dot_dimension_numbers<[1], [0], [0], [1], [0, 0, 1, 1], [], []>} : vector<8x16xf32>, vector<16x8xf32>, vector<8x8xf32> -> vector<8x8xf32>
    %c0_10 = arith.constant 0 : index
    %c0_11 = arith.constant 0 : index
    %7 = vector.load %arg4[%c0_10, %c0_11] : memref<32x8xf32, #tpu.memory_space<vmem>>, vector<8x8xf32>
    tpu.vector_store %arg4[%c0_10, %c0_11], %6 {strides = array<i32>} : memref<32x8xf32, #tpu.memory_space<vmem>>, vector<8x8xf32>,
    %c16 = arith.constant 16 : index
    %c0_12 = arith.constant 0 : index
    %8 = vector.load %arg5[%c16, %c0_12] : memref<64x8xf32, #tpu.memory_space<vmem>>, vector<16x8xf32>
    %cst_13 = arith.constant dense<0.000000e+00> : vector<8x8xf32>
    %9 = tpu.matmul %4, %8, %cst_13 {dimension_numbers = #tpu.dot_dimension_numbers<[1], [0], [0], [1], [0, 0, 1, 1], [], []>} : vector<8x16xf32>, vector<16x8xf32>, vector<8x8xf32> -> vector<8x8xf32>
    %c8 = arith.constant 8 : index
    %c0_14 = arith.constant 0 : index
    %10 = vector.load %arg4[%c8, %c0_14] : memref<32x8xf32, #tpu.memory_space<vmem>>, vector<8x8xf32>
    tpu.vector_store %arg4[%c8, %c0_14], %9 {strides = array<i32>} : memref<32x8xf32, #tpu.memory_space<vmem>>, vector<8x8xf32>,
    %c32 = arith.constant 32 : index
    %c0_15 = arith.constant 0 : index
    %11 = vector.load %arg5[%c32, %c0_15] : memref<64x8xf32, #tpu.memory_space<vmem>>, vector<16x8xf32>
    %cst_16 = arith.constant dense<0.000000e+00> : vector<8x8xf32>
    %12 = tpu.matmul %4, %11, %cst_16 {dimension_numbers = #tpu.dot_dimension_numbers<[1], [0], [0], [1], [0, 0, 1, 1], [], []>} : vector<8x16xf32>, vector<16x8xf32>, vector<8x8xf32> -> vector<8x8xf32>
    %c16_17 = arith.constant 16 : index
    %c0_18 = arith.constant 0 : index
    %13 = vector.load %arg4[%c16_17, %c0_18] : memref<32x8xf32, #tpu.memory_space<vmem>>, vector<8x8xf32>
    tpu.vector_store %arg4[%c16_17, %c0_18], %12 {strides = array<i32>} : memref<32x8xf32, #tpu.memory_space<vmem>>, vector<8x8xf32>,
    %c48 = arith.constant 48 : index
    %c0_19 = arith.constant 0 : index
    %14 = vector.load %arg5[%c48, %c0_19] : memref<64x8xf32, #tpu.memory_space<vmem>>, vector<16x8xf32>
    %cst_20 = arith.constant dense<0.000000e+00> : vector<8x8xf32>
    %15 = tpu.matmul %4, %14, %cst_20 {dimension_numbers = #tpu.dot_dimension_numbers<[1], [0], [0], [1], [0, 0, 1, 1], [], []>} : vector<8x16xf32>, vector<16x8xf32>, vector<8x8xf32> -> vector<8x8xf32>
    %c24 = arith.constant 24 : index
    %c0_21 = arith.constant 0 : index
    %16 = vector.load %arg4[%c24, %c0_21] : memref<32x8xf32, #tpu.memory_space<vmem>>, vector<8x8xf32>
    tpu.vector_store %arg4[%c24, %c0_21], %15 {strides = array<i32>} : memref<32x8xf32, #tpu.memory_space<vmem>>, vector<8x8xf32>,
    return
  }
  func.func @transform_0(%arg0: i32) -> (i32, i32) {
    %c0_i32 = arith.constant 0 : i32
    %c0_i32_0 = arith.constant 0 : i32
    %c0_i32_1 = arith.constant 0 : i32
    return %c0_i32, %c0_i32_0 : i32, i32
  }
  func.func @transform_1(%arg0: i32) -> (i32, i32) {
    %c0_i32 = arith.constant 0 : i32
    %c0_i32_0 = arith.constant 0 : i32
    return %arg0, %c0_i32 : i32, i32
  }
  func.func @transform_2(%arg0: i32) -> (i32, i32) {
    %c0_i32 = arith.constant 0 : i32
    %c0_i32_0 = arith.constant 0 : i32
    %c0_i32_1 = arith.constant 0 : i32
    return %c0_i32, %c0_i32_0 : i32, i32
  }
  func.func @transform_3(%arg0: i32) -> (i32, i32) {
    %c0_i32 = arith.constant 0 : i32
    %c0_i32_0 = arith.constant 0 : i32
    return %arg0, %c0_i32 : i32, i32
  }
}

</mosaic_0001>

<llo_original>
// kernel: tpu_custom_call.1
$region0: #{tpu_custom_call.1}
  #allocation0 [shape = 'u32[]', space=smem, size = 0x4, offset = 0x4, fixed_abs, tag = 'smem constant byte address 0x4 - core index']
  #allocation1 [shape = 'u32[144,128]{1,0:T(1,128)}', space=vmem, size = 0x12000, scoped, tag = 'internal scratch']
  #allocation2 [shape = 'f32[64,8]{1,0:T(8,128)}', space=vmem, size = 0x8000, scoped, tag = 'scratch operand']
  %s0 = inlined_call_operand.vmem [shape: f32[8,16], index: 0, kind: input, shape index: {}]
  %s1 = inlined_call_operand.vmem [shape: f32[128,16], index: 1, kind: input, shape index: {}]
  %s2 = inlined_call_operand.vmem [shape: f32[16,8], index: 2, kind: input, shape index: {}]
  %s3 = inlined_call_operand.vmem [shape: f32[64,8], index: 3, kind: output, shape index: {}]
  %s4 = sld [smem:[#allocation0]]
  $region45: #{tpu_custom_call.1} parent=0
    _
  %s6 = ssub.s32 1, %s4
  %s7 = scalar_select 0, %s6, %s4
  loop: start=0, step=1, limit=4
  $region2: #{tpu_custom_call.1} parent=0 // loop_pre_header
    _
  $region3: #{tpu_custom_call.1} parent=0 // loop_header
    %s9 = sphi 0, %s13
    %p10 = scmp.ge.s32.totalorder %s9, 4
    %s17 = sphi 0, %s17
    %s19 = sphi 0, %s17
    %s20 = sphi 0, %s19
    %s34 = sphi 0, %s20
    %s40 = sphi 0, %s42
    %s43 = sphi 0, %s40
    %s44 = sphi 0, %s43
    %s60 = sphi 0, %s44
    %s64 = sphi 0, %s64
    %s66 = sphi 0, %s64
    %s67 = sphi 0, %s66
    %s81 = sphi 0, %s67
    %s87 = sphi 0, %s89
    %s90 = sphi 0, %s87
    %s91 = sphi 0, %s90
    %s107 = sphi 0, %s91
  $region4: #{tpu_custom_call.1} parent=0 // loop_header_branch
    %12 = sbr.rel (%p10) target = $region8
  $region5: #{tpu_custom_call.1} parent=0 // loop_body
    %s14 = ssub.s32 %s9, 1
    %s15 = ssub.s32 %s9, 2
    %s16 = sadd.s32 %s9, 1
    %s18 = sadd.s32 %s17, 1
    %p21 = scmp.eq.s32.totalorder %s9, 1
    %p22 = scmp.ne.s32.totalorder %s17, %s19
    %p23 = scmp.eq.s32.totalorder %s9, 0
    %p24 = por %p22, %p23
    %p25 = scmp.ne.s32.totalorder %s17, %s19
    %p26 = scmp.eq.s32.totalorder %s14, 1
    %p27 = por %p25, %p26
    %p28 = scmp.ne.s32.totalorder %s19, %s20
    %p29 = scmp.eq.s32.totalorder %s14, 0
    %p30 = por %p28, %p29
    %p31 = scmp.ne.s32.totalorder %s19, %s20
    %p32 = scmp.eq.s32.totalorder %s15, 1
    %p33 = por %p31, %p32
    %p35 = scmp.ne.s32.totalorder %s20, %s34
    %p36 = scmp.eq.s32.totalorder %s15, 0
    %p37 = por %p35, %p36
    %s38 = ssub.s32 %s9, %s16
    %p39 = scmp.eq.s32.totalorder %s38, 0
    %s41 = sadd.s32 %s40, 1
    %s42 = scalar_select %p39, %s40, %s41
    %p45 = pneg %p39
    %p46 = scmp.eq.s32.totalorder %s9, 1
    %p47 = por %p45, %p46
    %p48 = scmp.ne.s32.totalorder %s40, %s43
    %p49 = scmp.eq.s32.totalorder %s9, 0
    %p50 = por %p48, %p49
    %p51 = scmp.ne.s32.totalorder %s40, %s43
    %p52 = scmp.eq.s32.totalorder %s14, 1
    %p53 = por %p51, %p52
    %p54 = scmp.ne.s32.totalorder %s43, %s44
    %p55 = scmp.eq.s32.totalorder %s14, 0
    %p56 = por %p54, %p55
    %p57 = scmp.ne.s32.totalorder %s43, %s44
    %p58 = scmp.eq.s32.totalorder %s15, 1
    %p59 = por %p57, %p58
    %p61 = scmp.ne.s32.totalorder %s44, %s60
    %p62 = scmp.eq.s32.totalorder %s15, 0
    %p63 = por %p61, %p62
    %s65 = sadd.s32 %s64, 1
    %p68 = scmp.eq.s32.totalorder %s9, 1
    %p69 = scmp.ne.s32.totalorder %s64, %s66
    %p70 = scmp.eq.s32.totalorder %s9, 0
    %p71 = por %p69, %p70
    %p72 = scmp.ne.s32.totalorder %s64, %s66
    %p73 = scmp.eq.s32.totalorder %s14, 1
    %p74 = por %p72, %p73
    %p75 = scmp.ne.s32.totalorder %s66, %s67
    %p76 = scmp.eq.s32.totalorder %s14, 0
    %p77 = por %p75, %p76
    %p78 = scmp.ne.s32.totalorder %s66, %s67
    %p79 = scmp.eq.s32.totalorder %s15, 1
    %p80 = por %p78, %p79
    %p82 = scmp.ne.s32.totalorder %s67, %s81
    %p83 = scmp.eq.s32.totalorder %s15, 0
    %p84 = por %p82, %p83
    %s85 = ssub.s32 %s9, %s16
    %p86 = scmp.eq.s32.totalorder %s85, 0
    %s88 = sadd.s32 %s87, 1
    %s89 = scalar_select %p86, %s87, %s88
    %p92 = pneg %p86
    %p93 = scmp.eq.s32.totalorder %s9, 1
    %p94 = por %p92, %p93
    %p95 = scmp.ne.s32.totalorder %s87, %s90
    %p96 = scmp.eq.s32.totalorder %s9, 0
    %p97 = por %p95, %p96
    %p98 = scmp.ne.s32.totalorder %s87, %s90
    %p99 = scmp.eq.s32.totalorder %s14, 1
    %p100 = por %p98, %p99
    %p101 = scmp.ne.s32.totalorder %s90, %s91
    %p102 = scmp.eq.s32.totalorder %s14, 0
    %p103 = por %p101, %p102
    %p104 = scmp.ne.s32.totalorder %s90, %s91
    %p105 = scmp.eq.s32.totalorder %s15, 1
    %p106 = por %p104, %p105
    %p108 = scmp.ne.s32.totalorder %s91, %s107
    %p109 = scmp.eq.s32.totalorder %s15, 0
    %p110 = por %p108, %p109
    %p111 = scmp.le.s32.totalorder 1, %s9
    %p112 = scmp.lt.s32.totalorder %s9, 3
    %p113 = pnand %p111, %p112
    %p114 = pneg %p113
    // Predicated region
    $region9: #{tpu_custom_call.1} parent=5 // pred_check
      _
    $region10: #{tpu_custom_call.1} parent=5 // pred_check_branch
      %116 = sbr.rel (%p113) target = $region12
    $region11: #{tpu_custom_call.1} parent=5 // pred_region
      %s117 = ssub.s32 %s9, 1
      // Predicated region
      $region13: #{tpu_custom_call.1} parent=11 // pred_check
        %p118 = pneg %p30
      $region14: #{tpu_custom_call.1} parent=11 // pred_check_branch
        %120 = sbr.rel (%p118) target = $region16
      $region15: #{tpu_custom_call.1} parent=11 // pred_region
        _
      $region16: #{tpu_custom_call.1} parent=11 // pred_fallthru
        _
      // Predicated region
      $region17: #{tpu_custom_call.1} parent=11 // pred_check
        %p121 = pneg %p77
      $region18: #{tpu_custom_call.1} parent=11 // pred_check_branch
        %123 = sbr.rel (%p121) target = $region20
      $region19: #{tpu_custom_call.1} parent=11 // pred_region
        _
      $region20: #{tpu_custom_call.1} parent=11 // pred_fallthru
        _
    $region12: #{tpu_custom_call.1} parent=5 // pred_fallthru
      _
    %p124 = scmp.lt.s32.totalorder %s9, 2
    // Predicated region
    $region21: #{tpu_custom_call.1} parent=5 // pred_check
      %p125 = pneg %p124
    $region22: #{tpu_custom_call.1} parent=5 // pred_check_branch
      %127 = sbr.rel (%p125) target = $region24
    $region23: #{tpu_custom_call.1} parent=5 // pred_region
      // Predicated region
      $region25: #{tpu_custom_call.1} parent=23 // pred_check
        %p128 = pneg %p50
      $region26: #{tpu_custom_call.1} parent=23 // pred_check_branch
        %130 = sbr.rel (%p128) target = $region28
      $region27: #{tpu_custom_call.1} parent=23 // pred_region
        %s131 = smul.u32 8, %s9
        %p132 = scmp.lt.s32.totalorder %s131, 15
        %s133 = scalar_select %p132, %s131, 15
        %s134 = smul.addr %s133, 8
        %s135 = scalar_lea.vmem %s1, %s134
        %s136 = smul.u32 8, %s9
      $region28: #{tpu_custom_call.1} parent=23 // pred_fallthru
        _
    $region24: #{tpu_custom_call.1} parent=5 // pred_fallthru
      _
    %p137 = scmp.le.s32.totalorder 1, %s9
    %p138 = scmp.lt.s32.totalorder %s9, 3
    %p139 = pnand %p137, %p138
    %p140 = pneg %p139
    // Predicated region
    $region29: #{tpu_custom_call.1} parent=5 // pred_check
      _
    $region30: #{tpu_custom_call.1} parent=5 // pred_check_branch
      %142 = sbr.rel (%p139) target = $region32
    $region31: #{tpu_custom_call.1} parent=5 // pred_region
      %s143 = ssub.s32 %s9, 1
      %p144 = pneg %p30
      %p145 = pneg %p27
      %s146 = smul.u32 8, %s14
      %p147 = scmp.lt.s32.totalorder %s146, 15
      %s148 = scalar_select %p147, %s146, 15
      %s149 = smul.addr %s148, 8
      %s150 = scalar_lea.vmem %s1, %s149
      %p151 = pneg %p56
      %p152 = pneg %p53
      %p153 = pneg %p77
      %p154 = pneg %p74
      %p155 = pneg %p103
      %p156 = pneg %p100
      %s157 = smul.u32 4, %s14
      %p158 = scmp.lt.s32.totalorder %s157, 7
      %s159 = scalar_select %p158, %s157, 7
      %s160 = smul.addr %s159, 8
      %s161 = scalar_lea.vmem %s3, %s160
      %s162 = smul.u32 8, %s14
      %p163 = scmp.lt.s32.totalorder %s162, 15
      %s164 = scalar_select %p163, %s162, 15
      %s165 = smul.addr %s164, 8
      %s166 = scalar_lea.vmem %s1, %s165
      %s167 = smul.u32 8, %s14
      %s168 = smul.u32 4, %s14
      %p169 = scmp.lt.s32.totalorder %s168, 7
      %s170 = scalar_select %p169, %s168, 7
      %s171 = smul.addr %s170, 8
      %s172 = scalar_lea.vmem %s3, %s171
      %s173 = smul.u32 4, %s14
      %v174 = vld [vmem:[%s166] sm:$0xff]
      %v175 = vld [vmem:[%s166 + $0x8] sm:$0xff]
      %v176 = vld [vmem:[%s166 + $0x10] sm:$0xff]
      %v177 = vld [vmem:[%s166 + $0x18] sm:$0xff]
      %v178 = vld [vmem:[%s166 + $0x20] sm:$0xff]
      %v179 = vld [vmem:[%s166 + $0x28] sm:$0xff]
      %v180 = vld [vmem:[%s166 + $0x30] sm:$0xff]
      %v181 = vld [vmem:[%s166 + $0x38] sm:$0xff]
      %v182 = vld [vmem:[%s2] sm:$0xff]
      %v183 = vld [vmem:[%s2 + $0x8] sm:$0xff]
      %vm184 = vcmask 130048
      %v186 = vsel %vm184, %v174, 0
      %v189 = vsel %vm184, %v175, 0
      %v192 = vsel %vm184, %v176, 0
      %v195 = vsel %vm184, %v177, 0
      %v198 = vsel %vm184, %v178, 0
      %v201 = vsel %vm184, %v179, 0
      %v204 = vsel %vm184, %v180, 0
      %v207 = vsel %vm184, %v181, 0
      %209 = vmatprep.subr.mxu0 0.0
      %210 = vmatpush1.msra.mxu0 %v182
      %211 = vmatprep.subr.mxu0 0.0
      %212 = vmatpush1.msra.mxu0 %v183
      %213 = vmatprep.subr.mxu0 0.0
      %214 = vmatpush1.msra.mxu0 0.0
      %215 = vmatprep.subr.mxu0 0.0
      %216 = vmatpush1.msra.mxu0 0.0
      %217 = vmatprep.subr.mxu0 0.0
      %218 = vmatpush1.msra.mxu0 0.0
      %219 = vmatprep.subr.mxu0 0.0
      %220 = vmatpush1.msra.mxu0 0.0
      %221 = vmatprep.subr.mxu0 0.0
      %222 = vmatpush1.msra.mxu0 0.0
      %223 = vmatprep.subr.mxu0 0.0
      %224 = vmatpush1.msra.mxu0 0.0
      %225 = vmatprep.subr.mxu0 0.0
      %226 = vmatpush1.msra.mxu0 0.0
      %227 = vmatprep.subr.mxu0 0.0
      %228 = vmatpush1.msra.mxu0 0.0
      %229 = vmatprep.subr.mxu0 0.0
      %230 = vmatpush1.msra.mxu0 0.0
      %231 = vmatprep.subr.mxu0 0.0
      %232 = vmatpush1.msra.mxu0 0.0
      %233 = vmatprep.subr.mxu0 0.0
      %234 = vmatpush1.msra.mxu0 0.0
      %235 = vmatprep.subr.mxu0 0.0
      %236 = vmatpush1.msra.mxu0 0.0
      %237 = vmatprep.subr.mxu0 0.0
      %238 = vmatpush1.msra.mxu0 0.0
      %239 = vmatprep.subr.mxu0 0.0
      %240 = vmatpush1.msra.mxu0 0.0
      %241 = vmatprep.subr.mxu0 0.0
      %242 = vmatpush1.msra.mxu0 0.0
      %243 = vmatprep.subr.mxu0 0.0
      %244 = vmatpush1.msra.mxu0 0.0
      %245 = vmatprep.subr.mxu0 0.0
      %246 = vmatpush1.msra.mxu0 0.0
      %247 = vmatprep.subr.mxu0 0.0
      %248 = vmatpush1.msra.mxu0 0.0
      %249 = vmatprep.subr.mxu0 0.0
      %250 = vmatpush1.msra.mxu0 0.0
      %251 = vmatprep.subr.mxu0 0.0
      %252 = vmatpush1.msra.mxu0 0.0
      %253 = vmatprep.subr.mxu0 0.0
      %254 = vmatpush1.msra.mxu0 0.0
      %255 = vmatprep.subr.mxu0 0.0
      %256 = vmatpush1.msra.mxu0 0.0
      %257 = vmatprep.subr.mxu0 0.0
      %258 = vmatpush1.msra.mxu0 0.0
      %259 = vmatprep.subr.mxu0 0.0
      %260 = vmatpush1.msra.mxu0 0.0
      %261 = vmatprep.subr.mxu0 0.0
      %262 = vmatpush1.msra.mxu0 0.0
      %263 = vmatprep.subr.mxu0 0.0
      %264 = vmatpush1.msra.mxu0 0.0
      %265 = vmatprep.subr.mxu0 0.0
      %266 = vmatpush1.msra.mxu0 0.0
      %267 = vmatprep.subr.mxu0 0.0
      %268 = vmatpush1.msra.mxu0 0.0
      %269 = vmatprep.subr.mxu0 0.0
      %270 = vmatpush1.msra.mxu0 0.0
      %271 = vmatprep.subr.mxu0 0.0
      %272 = vmatpush1.msra.mxu0 0.0
      %273 = vmatprep.mubr.f32.mxu0 0.0
      %274 = vmatmul.mubr.f32.gmra.mrb[0].mxu0 %v186
      %v275 = vpop.f32.mrb[0].mxu0
      %v276 = vadd.f32 0.0, %v275
      %v277 = vpop.f32.mrb[0].mxu0
      %278 = vmatprep.mubr.f32.mxu0 0.0
      %279 = vmatmul.mubr.f32.gmra.mrb[0].mxu0 %v189
      %v280 = vpop.f32.mrb[0].mxu0
      %v281 = vadd.f32 0.0, %v280
      %v282 = vpop.f32.mrb[0].mxu0
      %283 = vmatprep.mubr.f32.mxu0 0.0
      %284 = vmatmul.mubr.f32.gmra.mrb[0].mxu0 %v192
      %v285 = vpop.f32.mrb[0].mxu0
      %v286 = vadd.f32 0.0, %v285
      %v287 = vpop.f32.mrb[0].mxu0
      %288 = vmatprep.mubr.f32.mxu0 0.0
      %289 = vmatmul.mubr.f32.gmra.mrb[0].mxu0 %v195
      %v290 = vpop.f32.mrb[0].mxu0
      %v291 = vadd.f32 0.0, %v290
      %v292 = vpop.f32.mrb[0].mxu0
      %293 = vmatprep.mubr.f32.mxu0 0.0
      %294 = vmatmul.mubr.f32.gmra.mrb[0].mxu0 %v198
      %v295 = vpop.f32.mrb[0].mxu0
      %v296 = vadd.f32 0.0, %v295
      %v297 = vpop.f32.mrb[0].mxu0
      %298 = vmatprep.mubr.f32.mxu0 0.0
      %299 = vmatmul.mubr.f32.gmra.mrb[0].mxu0 %v201
      %v300 = vpop.f32.mrb[0].mxu0
      %v301 = vadd.f32 0.0, %v300
      %v302 = vpop.f32.mrb[0].mxu0
      %303 = vmatprep.mubr.f32.mxu0 0.0
      %304 = vmatmul.mubr.f32.gmra.mrb[0].mxu0 %v204
      %v305 = vpop.f32.mrb[0].mxu0
      %v306 = vadd.f32 0.0, %v305
      %v307 = vpop.f32.mrb[0].mxu0
      %308 = vmatprep.mubr.f32.mxu0 0.0
      %309 = vmatmul.mubr.f32.gmra.mrb[0].mxu0 %v207
      %v310 = vpop.f32.mrb[0].mxu0
      %v311 = vadd.f32 0.0, %v310
      %v312 = vpop.f32.mrb[0].mxu0
      %313 = vdwg.mxu0
      %vm314 = vcmask 64512
      %315 = vst.msk [vmem:[#allocation2] sm:$0xff] %vm314, %v276
      %316 = vst.msk [vmem:[#allocation2 + $0x8] sm:$0xff] %vm314, %v281
      %317 = vst.msk [vmem:[#allocation2 + $0x10] sm:$0xff] %vm314, %v286
      %318 = vst.msk [vmem:[#allocation2 + $0x18] sm:$0xff] %vm314, %v291
      %319 = vst.msk [vmem:[#allocation2 + $0x20] sm:$0xff] %vm314, %v296
      %320 = vst.msk [vmem:[#allocation2 + $0x28] sm:$0xff] %vm314, %v301
      %321 = vst.msk [vmem:[#allocation2 + $0x30] sm:$0xff] %vm314, %v306
      %322 = vst.msk [vmem:[#allocation2 + $0x38] sm:$0xff] %vm314, %v311
      %v323 = vld [vmem:[%s0] sm:$0xff]
      %v324 = vld [vmem:[#allocation2] sm:$0xff]
      %v325 = vld [vmem:[#allocation2 + $0x8] sm:$0xff]
      %v327 = vsel %vm184, %v323, 0
      %329 = vmatprep.subr.mxu0 0.0
      %330 = vmatpush1.msra.mxu0 %v324
      %331 = vmatprep.subr.mxu0 0.0
      %332 = vmatpush1.msra.mxu0 %v325
      %333 = vmatprep.subr.mxu0 0.0
      %334 = vmatpush1.msra.mxu0 0.0
      %335 = vmatprep.subr.mxu0 0.0
      %336 = vmatpush1.msra.mxu0 0.0
      %337 = vmatprep.subr.mxu0 0.0
      %338 = vmatpush1.msra.mxu0 0.0
      %339 = vmatprep.subr.mxu0 0.0
      %340 = vmatpush1.msra.mxu0 0.0
      %341 = vmatprep.subr.mxu0 0.0
      %342 = vmatpush1.msra.mxu0 0.0
      %343 = vmatprep.subr.mxu0 0.0
      %344 = vmatpush1.msra.mxu0 0.0
      %345 = vmatprep.subr.mxu0 0.0
      %346 = vmatpush1.msra.mxu0 0.0
      %347 = vmatprep.subr.mxu0 0.0
      %348 = vmatpush1.msra.mxu0 0.0
      %349 = vmatprep.subr.mxu0 0.0
      %350 = vmatpush1.msra.mxu0 0.0
      %351 = vmatprep.subr.mxu0 0.0
      %352 = vmatpush1.msra.mxu0 0.0
      %353 = vmatprep.subr.mxu0 0.0
      %354 = vmatpush1.msra.mxu0 0.0
      %355 = vmatprep.subr.mxu0 0.0
      %356 = vmatpush1.msra.mxu0 0.0
      %357 = vmatprep.subr.mxu0 0.0
      %358 = vmatpush1.msra.mxu0 0.0
      %359 = vmatprep.subr.mxu0 0.0
      %360 = vmatpush1.msra.mxu0 0.0
      %361 = vmatprep.subr.mxu0 0.0
      %362 = vmatpush1.msra.mxu0 0.0
      %363 = vmatprep.subr.mxu0 0.0
      %364 = vmatpush1.msra.mxu0 0.0
      %365 = vmatprep.subr.mxu0 0.0
      %366 = vmatpush1.msra.mxu0 0.0
      %367 = vmatprep.subr.mxu0 0.0
      %368 = vmatpush1.msra.mxu0 0.0
      %369 = vmatprep.subr.mxu0 0.0
      %370 = vmatpush1.msra.mxu0 0.0
      %371 = vmatprep.subr.mxu0 0.0
      %372 = vmatpush1.msra.mxu0 0.0
      %373 = vmatprep.subr.mxu0 0.0
      %374 = vmatpush1.msra.mxu0 0.0
      %375 = vmatprep.subr.mxu0 0.0
      %376 = vmatpush1.msra.mxu0 0.0
      %377 = vmatprep.subr.mxu0 0.0
      %378 = vmatpush1.msra.mxu0 0.0
      %379 = vmatprep.subr.mxu0 0.0
      %380 = vmatpush1.msra.mxu0 0.0
      %381 = vmatprep.subr.mxu0 0.0
      %382 = vmatpush1.msra.mxu0 0.0
      %383 = vmatprep.subr.mxu0 0.0
      %384 = vmatpush1.msra.mxu0 0.0
      %385 = vmatprep.subr.mxu0 0.0
      %386 = vmatpush1.msra.mxu0 0.0
      %387 = vmatprep.subr.mxu0 0.0
      %388 = vmatpush1.msra.mxu0 0.0
      %389 = vmatprep.subr.mxu0 0.0
      %390 = vmatpush1.msra.mxu0 0.0
      %391 = vmatprep.subr.mxu0 0.0
      %392 = vmatpush1.msra.mxu0 0.0
      %393 = vmatprep.mubr.f32.mxu0 0.0
      %394 = vmatmul.mubr.f32.gmra.mrb[0].mxu0 %v327
      %v395 = vpop.f32.mrb[0].mxu0
      %v396 = vadd.f32 0.0, %v395
      %v397 = vpop.f32.mrb[0].mxu0
      %398 = vdwg.mxu0
      %399 = vst.msk [vmem:[%s172] sm:$0xff] %vm314, %v396
      %v400 = vld [vmem:[#allocation2 + $0x10] sm:$0xff]
      %v401 = vld [vmem:[#allocation2 + $0x18] sm:$0xff]
      %402 = vmatprep.subr.mxu0 0.0
      %403 = vmatpush1.msra.mxu0 %v400
      %404 = vmatprep.subr.mxu0 0.0
      %405 = vmatpush1.msra.mxu0 %v401
      %406 = vmatprep.subr.mxu0 0.0
      %407 = vmatpush1.msra.mxu0 0.0
      %408 = vmatprep.subr.mxu0 0.0
      %409 = vmatpush1.msra.mxu0 0.0
      %410 = vmatprep.subr.mxu0 0.0
      %411 = vmatpush1.msra.mxu0 0.0
      %412 = vmatprep.subr.mxu0 0.0
      %413 = vmatpush1.msra.mxu0 0.0
      %414 = vmatprep.subr.mxu0 0.0
      %415 = vmatpush1.msra.mxu0 0.0
      %416 = vmatprep.subr.mxu0 0.0
      %417 = vmatpush1.msra.mxu0 0.0
      %418 = vmatprep.subr.mxu0 0.0
      %419 = vmatpush1.msra.mxu0 0.0
      %420 = vmatprep.subr.mxu0 0.0
      %421 = vmatpush1.msra.mxu0 0.0
      %422 = vmatprep.subr.mxu0 0.0
      %423 = vmatpush1.msra.mxu0 0.0
      %424 = vmatprep.subr.mxu0 0.0
      %425 = vmatpush1.msra.mxu0 0.0
      %426 = vmatprep.subr.mxu0 0.0
      %427 = vmatpush1.msra.mxu0 0.0
      %428 = vmatprep.subr.mxu0 0.0
      %429 = vmatpush1.msra.mxu0 0.0
      %430 = vmatprep.subr.mxu0 0.0
      %431 = vmatpush1.msra.mxu0 0.0
      %432 = vmatprep.subr.mxu0 0.0
      %433 = vmatpush1.msra.mxu0 0.0
      %434 = vmatprep.subr.mxu0 0.0
      %435 = vmatpush1.msra.mxu0 0.0
      %436 = vmatprep.subr.mxu0 0.0
      %437 = vmatpush1.msra.mxu0 0.0
      %438 = vmatprep.subr.mxu0 0.0
      %439 = vmatpush1.msra.mxu0 0.0
      %440 = vmatprep.subr.mxu0 0.0
      %441 = vmatpush1.msra.mxu0 0.0
      %442 = vmatprep.subr.mxu0 0.0
      %443 = vmatpush1.msra.mxu0 0.0
      %444 = vmatprep.subr.mxu0 0.0
      %445 = vmatpush1.msra.mxu0 0.0
      %446 = vmatprep.subr.mxu0 0.0
      %447 = vmatpush1.msra.mxu0 0.0
      %448 = vmatprep.subr.mxu0 0.0
      %449 = vmatpush1.msra.mxu0 0.0
      %450 = vmatprep.subr.mxu0 0.0
      %451 = vmatpush1.msra.mxu0 0.0
      %452 = vmatprep.subr.mxu0 0.0
      %453 = vmatpush1.msra.mxu0 0.0
      %454 = vmatprep.subr.mxu0 0.0
      %455 = vmatpush1.msra.mxu0 0.0
      %456 = vmatprep.subr.mxu0 0.0
      %457 = vmatpush1.msra.mxu0 0.0
      %458 = vmatprep.subr.mxu0 0.0
      %459 = vmatpush1.msra.mxu0 0.0
      %460 = vmatprep.subr.mxu0 0.0
      %461 = vmatpush1.msra.mxu0 0.0
      %462 = vmatprep.subr.mxu0 0.0
      %463 = vmatpush1.msra.mxu0 0.0
      %464 = vmatprep.subr.mxu0 0.0
      %465 = vmatpush1.msra.mxu0 0.0
      %466 = vmatprep.mubr.f32.mxu0 0.0
      %467 = vmatmul.mubr.f32.gmra.mrb[0].mxu0 %v327
      %v468 = vpop.f32.mrb[0].mxu0
      %v469 = vadd.f32 0.0, %v468
      %v470 = vpop.f32.mrb[0].mxu0
      %471 = vdwg.mxu0
      %472 = vst.msk [vmem:[%s172 + $0x8] sm:$0xff] %vm314, %v469
      %v473 = vld [vmem:[#allocation2 + $0x20] sm:$0xff]
      %v474 = vld [vmem:[#allocation2 + $0x28] sm:$0xff]
      %475 = vmatprep.subr.mxu0 0.0
      %476 = vmatpush1.msra.mxu0 %v473
      %477 = vmatprep.subr.mxu0 0.0
      %478 = vmatpush1.msra.mxu0 %v474
      %479 = vmatprep.subr.mxu0 0.0
      %480 = vmatpush1.msra.mxu0 0.0
      %481 = vmatprep.subr.mxu0 0.0
      %482 = vmatpush1.msra.mxu0 0.0
      %483 = vmatprep.subr.mxu0 0.0
      %484 = vmatpush1.msra.mxu0 0.0
      %485 = vmatprep.subr.mxu0 0.0
      %486 = vmatpush1.msra.mxu0 0.0
      %487 = vmatprep.subr.mxu0 0.0
      %488 = vmatpush1.msra.mxu0 0.0
      %489 = vmatprep.subr.mxu0 0.0
      %490 = vmatpush1.msra.mxu0 0.0
      %491 = vmatprep.subr.mxu0 0.0
      %492 = vmatpush1.msra.mxu0 0.0
      %493 = vmatprep.subr.mxu0 0.0
      %494 = vmatpush1.msra.mxu0 0.0
      %495 = vmatprep.subr.mxu0 0.0
      %496 = vmatpush1.msra.mxu0 0.0
      %497 = vmatprep.subr.mxu0 0.0
      %498 = vmatpush1.msra.mxu0 0.0
      %499 = vmatprep.subr.mxu0 0.0
      %500 = vmatpush1.msra.mxu0 0.0
      %501 = vmatprep.subr.mxu0 0.0
      %502 = vmatpush1.msra.mxu0 0.0
      %503 = vmatprep.subr.mxu0 0.0
      %504 = vmatpush1.msra.mxu0 0.0
      %505 = vmatprep.subr.mxu0 0.0
      %506 = vmatpush1.msra.mxu0 0.0
      %507 = vmatprep.subr.mxu0 0.0
      %508 = vmatpush1.msra.mxu0 0.0
      %509 = vmatprep.subr.mxu0 0.0
      %510 = vmatpush1.msra.mxu0 0.0
      %511 = vmatprep.subr.mxu0 0.0
      %512 = vmatpush1.msra.mxu0 0.0
      %513 = vmatprep.subr.mxu0 0.0
      %514 = vmatpush1.msra.mxu0 0.0
      %515 = vmatprep.subr.mxu0 0.0
      %516 = vmatpush1.msra.mxu0 0.0
      %517 = vmatprep.subr.mxu0 0.0
      %518 = vmatpush1.msra.mxu0 0.0
      %519 = vmatprep.subr.mxu0 0.0
      %520 = vmatpush1.msra.mxu0 0.0
      %521 = vmatprep.subr.mxu0 0.0
      %522 = vmatpush1.msra.mxu0 0.0
      %523 = vmatprep.subr.mxu0 0.0
      %524 = vmatpush1.msra.mxu0 0.0
      %525 = vmatprep.subr.mxu0 0.0
      %526 = vmatpush1.msra.mxu0 0.0
      %527 = vmatprep.subr.mxu0 0.0
      %528 = vmatpush1.msra.mxu0 0.0
      %529 = vmatprep.subr.mxu0 0.0
      %530 = vmatpush1.msra.mxu0 0.0
      %531 = vmatprep.subr.mxu0 0.0
      %532 = vmatpush1.msra.mxu0 0.0
      %533 = vmatprep.subr.mxu0 0.0
      %534 = vmatpush1.msra.mxu0 0.0
      %535 = vmatprep.subr.mxu0 0.0
      %536 = vmatpush1.msra.mxu0 0.0
      %537 = vmatprep.subr.mxu0 0.0
      %538 = vmatpush1.msra.mxu0 0.0
      %539 = vmatprep.mubr.f32.mxu0 0.0
      %540 = vmatmul.mubr.f32.gmra.mrb[0].mxu0 %v327
      %v541 = vpop.f32.mrb[0].mxu0
      %v542 = vadd.f32 0.0, %v541
      %v543 = vpop.f32.mrb[0].mxu0
      %544 = vdwg.mxu0
      %545 = vst.msk [vmem:[%s172 + $0x10] sm:$0xff] %vm314, %v542
      %v546 = vld [vmem:[#allocation2 + $0x30] sm:$0xff]
      %v547 = vld [vmem:[#allocation2 + $0x38] sm:$0xff]
      %548 = vmatprep.subr.mxu0 0.0
      %549 = vmatpush1.msra.mxu0 %v546
      %550 = vmatprep.subr.mxu0 0.0
      %551 = vmatpush1.msra.mxu0 %v547
      %552 = vmatprep.subr.mxu0 0.0
      %553 = vmatpush1.msra.mxu0 0.0
      %554 = vmatprep.subr.mxu0 0.0
      %555 = vmatpush1.msra.mxu0 0.0
      %556 = vmatprep.subr.mxu0 0.0
      %557 = vmatpush1.msra.mxu0 0.0
      %558 = vmatprep.subr.mxu0 0.0
      %559 = vmatpush1.msra.mxu0 0.0
      %560 = vmatprep.subr.mxu0 0.0
      %561 = vmatpush1.msra.mxu0 0.0
      %562 = vmatprep.subr.mxu0 0.0
      %563 = vmatpush1.msra.mxu0 0.0
      %564 = vmatprep.subr.mxu0 0.0
      %565 = vmatpush1.msra.mxu0 0.0
      %566 = vmatprep.subr.mxu0 0.0
      %567 = vmatpush1.msra.mxu0 0.0
      %568 = vmatprep.subr.mxu0 0.0
      %569 = vmatpush1.msra.mxu0 0.0
      %570 = vmatprep.subr.mxu0 0.0
      %571 = vmatpush1.msra.mxu0 0.0
      %572 = vmatprep.subr.mxu0 0.0
      %573 = vmatpush1.msra.mxu0 0.0
      %574 = vmatprep.subr.mxu0 0.0
      %575 = vmatpush1.msra.mxu0 0.0
      %576 = vmatprep.subr.mxu0 0.0
      %577 = vmatpush1.msra.mxu0 0.0
      %578 = vmatprep.subr.mxu0 0.0
      %579 = vmatpush1.msra.mxu0 0.0
      %580 = vmatprep.subr.mxu0 0.0
      %581 = vmatpush1.msra.mxu0 0.0
      %582 = vmatprep.subr.mxu0 0.0
      %583 = vmatpush1.msra.mxu0 0.0
      %584 = vmatprep.subr.mxu0 0.0
      %585 = vmatpush1.msra.mxu0 0.0
      %586 = vmatprep.subr.mxu0 0.0
      %587 = vmatpush1.msra.mxu0 0.0
      %588 = vmatprep.subr.mxu0 0.0
      %589 = vmatpush1.msra.mxu0 0.0
      %590 = vmatprep.subr.mxu0 0.0
      %591 = vmatpush1.msra.mxu0 0.0
      %592 = vmatprep.subr.mxu0 0.0
      %593 = vmatpush1.msra.mxu0 0.0
      %594 = vmatprep.subr.mxu0 0.0
      %595 = vmatpush1.msra.mxu0 0.0
      %596 = vmatprep.subr.mxu0 0.0
      %597 = vmatpush1.msra.mxu0 0.0
      %598 = vmatprep.subr.mxu0 0.0
      %599 = vmatpush1.msra.mxu0 0.0
      %600 = vmatprep.subr.mxu0 0.0
      %601 = vmatpush1.msra.mxu0 0.0
      %602 = vmatprep.subr.mxu0 0.0
      %603 = vmatpush1.msra.mxu0 0.0
      %604 = vmatprep.subr.mxu0 0.0
      %605 = vmatpush1.msra.mxu0 0.0
      %606 = vmatprep.subr.mxu0 0.0
      %607 = vmatpush1.msra.mxu0 0.0
      %608 = vmatprep.subr.mxu0 0.0
      %609 = vmatpush1.msra.mxu0 0.0
      %610 = vmatprep.subr.mxu0 0.0
      %611 = vmatpush1.msra.mxu0 0.0
      %612 = vmatprep.mubr.f32.mxu0 0.0
      %613 = vmatmul.mubr.f32.gmra.mrb[0].mxu0 %v327
      %v614 = vpop.f32.mrb[0].mxu0
      %v615 = vadd.f32 0.0, %v614
      %v616 = vpop.f32.mrb[0].mxu0
      %617 = vdwg.mxu0
      %618 = vst.msk [vmem:[%s172 + $0x18] sm:$0xff] %vm314, %v615
      %s619 = smul.u32 4, %s14
      %p620 = scmp.lt.s32.totalorder %s619, 7
      %s621 = scalar_select %p620, %s619, 7
      %s622 = smul.addr %s621, 8
      %s623 = scalar_lea.vmem %s3, %s622
      // Predicated region
      $region33: #{tpu_custom_call.1} parent=31 // pred_check
        %p624 = pneg %p100
      $region34: #{tpu_custom_call.1} parent=31 // pred_check_branch
        %626 = sbr.rel (%p624) target = $region36
      $region35: #{tpu_custom_call.1} parent=31 // pred_region
        %s627 = smul.u32 4, %s14
      $region36: #{tpu_custom_call.1} parent=31 // pred_fallthru
        _
    $region32: #{tpu_custom_call.1} parent=5 // pred_fallthru
      _
    %p628 = scmp.le.s32.totalorder 2, %s9
    // Predicated region
    $region37: #{tpu_custom_call.1} parent=5 // pred_check
      %p629 = pneg %p628
    $region38: #{tpu_custom_call.1} parent=5 // pred_check_branch
      %631 = sbr.rel (%p629) target = $region40
    $region39: #{tpu_custom_call.1} parent=5 // pred_region
      %s632 = ssub.s32 %s9, 2
      // Predicated region
      $region41: #{tpu_custom_call.1} parent=39 // pred_check
        %p633 = pneg %p106
      $region42: #{tpu_custom_call.1} parent=39 // pred_check_branch
        %635 = sbr.rel (%p633) target = $region44
      $region43: #{tpu_custom_call.1} parent=39 // pred_region
        %s636 = smul.u32 4, %s15
        %p637 = scmp.lt.s32.totalorder %s636, 7
        %s638 = scalar_select %p637, %s636, 7
        %s639 = smul.addr %s638, 8
        %s640 = scalar_lea.vmem %s3, %s639
      $region44: #{tpu_custom_call.1} parent=39 // pred_fallthru
        _
    $region40: #{tpu_custom_call.1} parent=5 // pred_fallthru
      _
  $region6: #{tpu_custom_call.1} parent=0 // loop_footer
    %s13 = sadd.s32 1, %s9
  $region7: #{tpu_custom_call.1} parent=0 // loop_footer_branch
    %8 = sbr.rel target = $region3
  $region8: #{tpu_custom_call.1} parent=0 // loop_exit
    _

</llo_original>
